<compile_context>
chip_gen: v7x
topology: tpu7x:2x2x1
jax: 0.10.0
libtpu: 0.0.40
codegen_flags: <defaults>
</compile_context>

<pallas_src>
from functools import partial

import jax
import jax.numpy as jnp
from jax.experimental import pallas as pl
from jax.experimental.pallas import tpu as pltpu


def _round_up(x, m):
    return (x + m - 1) // m * m


# ---------------------------------------------------------------------------
# Kernel: one batch tile per grid step; weights resident across the grid.
# ---------------------------------------------------------------------------
def _make_moe_kernel(num_experts):
    NE = num_experts

    def kernel(x_ref,             # (TB, E)        bf16
               wg_ref, bg_ref,    # (E, 2NE) bf16, (1, 2NE) f32    fused gates
               w1_ref, b1_ref,    # (E, NE*H) bf16, (1, NE*H) f32  all experts, layer 1
               r_ref,             # (NE, NE*H) bf16                0/1 block replication
               w2h_ref, b2h_ref,  # (NE*H, P) bf16, (NE, P) bf16   layer 2 with heads folded in
               bh_ref,            # (1, P) f32                     fused, lane-padded head bias
               out_ref):          # (2, TB, P) f32  [0]=classification rows, [1]=sentiment rows
        TB = out_ref.shape[1]
        x = x_ref[...]                                                     # (TB, E) bf16

        # Fused gate projection -> two explicit softmaxes (divide on the EUP).
        g_log = jnp.dot(x, wg_ref[...], preferred_element_type=jnp.float32) + bg_ref[...]

        def _softmax(logits):
            m = jnp.max(logits, axis=-1, keepdims=True)
            e = jnp.exp(logits - m)
            return e * pl.reciprocal(jnp.sum(e, axis=-1, keepdims=True), approx=True)

        gate_c = _softmax(g_log[:, :NE])                                   # (TB, NE) f32
        gate_s = _softmax(g_log[:, NE:])                                   # (TB, NE) f32
        gates = jnp.concatenate([gate_c, gate_s], axis=0).astype(jnp.bfloat16)  # (2TB, NE)

        # All experts' first layer in ONE matmul: (TB, E) @ (E, NE*H).
        h = jnp.dot(x, w1_ref[...], preferred_element_type=jnp.float32) + b1_ref[...]
        h = jnp.maximum(h, 0.0)                                            # (TB, NE*H) f32

        # Gate-weighted expert mix folded into layer 2 (heads pre-folded into w2h/b2h):
        #   sum_e g_e*(h_e @ W2_e + b2_e) @ Wh
        #     = ((gates @ R) * [h; h]) @ (W2 @ Wh)  +  gates @ (b2 @ Wh)
        gb = jnp.dot(gates, r_ref[...], preferred_element_type=jnp.float32)     # (2TB, NE*H)
        h2 = jnp.concatenate([h, h], axis=0)                                     # (2TB, NE*H)
        hw = (gb * h2).astype(jnp.bfloat16)                                      # (2TB, NE*H)

        out = jnp.dot(hw, w2h_ref[...], preferred_element_type=jnp.float32)      # (2TB, P)
        out = out + jnp.dot(gates, b2h_ref[...], preferred_element_type=jnp.float32)
        out = out + bh_ref[...]

        # Rows [0:TB] = classification task, rows [TB:2TB] = sentiment task. Each
        # row passes through BOTH heads' columns of the fused w2h; the wrapper only
        # reads cols [0:C] of task 0 and cols [C:C+2] of task 1 (rest is discarded).
        out_ref[0] = out[:TB].astype(out_ref.dtype)
        out_ref[1] = out[TB:].astype(out_ref.dtype)

    return kernel


# ---------------------------------------------------------------------------
# Parameter packing: fuse / fold / quantize ONCE (hoisted out of the forward).
# ---------------------------------------------------------------------------
def pack_params(p):
    NE, E, H = p["w1"].shape
    Bn = p["w2"].shape[2]
    C = p["whc"].shape[1]
    P = max(128, _round_up(C + 2, 128))      # lane-dense padded head width

    wg = jnp.concatenate([p["wgc"], p["wgs"]], axis=1).astype(jnp.bfloat16)          # (E, 2NE)
    bg = jnp.concatenate([p["bgc"], p["bgs"]], axis=1).astype(jnp.float32)           # (1, 2NE)
    w1 = jnp.transpose(p["w1"], (1, 0, 2)).reshape(E, NE * H).astype(jnp.bfloat16)   # (E, NE*H)
    b1 = p["b1"].reshape(1, NE * H).astype(jnp.float32)                              # (1, NE*H)

    # Fused lane-padded head: cols [0:C] = classification, [C:C+2] = sentiment.
    wh = (jnp.zeros((Bn, P), jnp.float32)
          .at[:, :C].set(p["whc"]).at[:, C:C + 2].set(p["whs"]))                     # (Bn, P)
    bh = (jnp.zeros((1, P), jnp.float32)
          .at[:, :C].set(p["bhc"]).at[:, C:C + 2].set(p["bhs"]))                     # (1, P)

    # Fold the head into layer 2 (f32 on the host, quantize once).
    w2h = (p["w2"].reshape(NE * H, Bn) @ wh).astype(jnp.bfloat16)                    # (NE*H, P)
    b2h = (p["b2"].reshape(NE, Bn) @ wh).astype(jnp.bfloat16)                        # (NE, P)

    # 0/1 block-replication matrix: row e is 1 on columns [e*H, (e+1)*H).
    r = jnp.repeat(jnp.eye(NE, dtype=jnp.float32), H, axis=1).astype(jnp.bfloat16)   # (NE, NE*H)

    packed = dict(wg=wg, bg=bg, w1=w1, b1=b1, r=r, w2h=w2h, b2h=b2h, bh=bh)
    meta = (NE, H, C, P)
    return packed, meta


# ---------------------------------------------------------------------------
# Jitted forward wrapper.
# ---------------------------------------------------------------------------
@partial(jax.jit, static_argnames=("meta", "tile_b"))
def moe_multitask_forward(cls_embedding, packed, meta, tile_b=64):
    """cls_embedding: (B, E) f32. Returns (class_logits (B, C), sentiment_logits (B, 2))."""
    NE, H, C, P = meta
    B, E = cls_embedding.shape

    TB = min(tile_b, _round_up(B, 8))        # batch tile (multiple of 8)
    B_pad = _round_up(B, TB)
    x = cls_embedding.astype(jnp.bfloat16)
    if B_pad != B:
        x = jnp.pad(x, ((0, B_pad - B), (0, 0)))

    # Weights: full-array blocks with a constant index_map -> fetched once,
    # resident across all batch-tile grid steps.
    resident = lambda a: pl.BlockSpec(a.shape, lambda i: (0, 0))

    out = pl.pallas_call(
        _make_moe_kernel(NE),
        out_shape=jax.ShapeDtypeStruct((2, B_pad, P), jnp.float32),
        grid=(B_pad // TB,),
        in_specs=[
            pl.BlockSpec((TB, E), lambda i: (i, 0)),
            resident(packed["wg"]), resident(packed["bg"]),
            resident(packed["w1"]), resident(packed["b1"]),
            resident(packed["r"]),
            resident(packed["w2h"]), resident(packed["b2h"]),
            resident(packed["bh"]),
        ],
        out_specs=pl.BlockSpec((2, TB, P), lambda i: (0, i, 0)),
        compiler_params=pltpu.CompilerParams(
            dimension_semantics=("parallel",),       # both TensorCores on v7x
            vmem_limit_bytes=32 * 1024 * 1024),      # v5e default (16 MiB) too tight at prod sizes
    )(x, packed["wg"], packed["bg"], packed["w1"], packed["b1"],
      packed["r"], packed["w2h"], packed["b2h"], packed["bh"])

    class_logits = out[0, :B, :C]
    sentiment_logits = out[1, :B, C:C + 2]
    return class_logits, sentiment_logits


# ---------------------------------------------------------------------------
# References.
# ---------------------------------------------------------------------------
def reference_forward_f32(x, p):
    """Pure-f32 math matching the PyTorch module semantics."""
    gc = jax.nn.softmax(x @ p["wgc"] + p["bgc"], axis=-1)
    gs = jax.nn.softmax(x @ p["wgs"] + p["bgs"], axis=-1)
    h = jnp.maximum(jnp.einsum("be,neh->bnh", x, p["w1"]) + p["b1"][:, 0, :][None], 0.0)
    eo = jnp.einsum("bnh,nhd->bnd", h, p["w2"]) + p["b2"][:, 0, :][None]
    wc = jnp.sum(gc[..., None] * eo, axis=1)
    ws = jnp.sum(gs[..., None] * eo, axis=1)
    return wc @ p["whc"] + p["bhc"], ws @ p["whs"] + p["bhs"]


def reference_forward_mirror(cls_embedding, packed, meta):
    """f32 math on the same bf16-quantized / head-folded operands the kernel uses."""
    NE, H, C, P = meta
    B = cls_embedding.shape[0]
    f32 = lambda a: a.astype(jnp.float32)

    x = f32(cls_embedding.astype(jnp.bfloat16))
    g_log = x @ f32(packed["wg"]) + packed["bg"]
    gc = jax.nn.softmax(g_log[:, :NE], axis=-1)
    gs = jax.nn.softmax(g_log[:, NE:], axis=-1)
    gates = f32(jnp.concatenate([gc, gs], axis=0).astype(jnp.bfloat16))
    h = jnp.maximum(x @ f32(packed["w1"]) + packed["b1"], 0.0)
    gb = gates @ f32(packed["r"])
    hw = f32((gb * jnp.concatenate([h, h], axis=0)).astype(jnp.bfloat16))
    out = hw @ f32(packed["w2h"]) + gates @ f32(packed["b2h"]) + packed["bh"]
    return out[:B, :C], out[B:, C:C + 2]


def init_params(key, E, H, Bn, NE, C):
    ks = jax.random.split(key, 12)
    s = 0.05
    return {
        "wgc": s * jax.random.normal(ks[0], (E, NE), jnp.float32),
        "bgc": s * jax.random.normal(ks[1], (1, NE), jnp.float32),
        "wgs": s * jax.random.normal(ks[2], (E, NE), jnp.float32),
        "bgs": s * jax.random.normal(ks[3], (1, NE), jnp.float32),
        "w1":  s * jax.random.normal(ks[4], (NE, E, H), jnp.float32),
        "b1":  s * jax.random.normal(ks[5], (NE, 1, H), jnp.float32),
        "w2":  s * jax.random.normal(ks[6], (NE, H, Bn), jnp.float32),
        "b2":  s * jax.random.normal(ks[7], (NE, 1, Bn), jnp.float32),
        "whc": s * jax.random.normal(ks[8], (Bn, C), jnp.float32),
        "bhc": s * jax.random.normal(ks[9], (1, C), jnp.float32),
        "whs": s * jax.random.normal(ks[10], (Bn, 2), jnp.float32),
        "bhs": s * jax.random.normal(ks[11], (1, 2), jnp.float32),
    }


if __name__ == "__main__":
    # Small shapes consistent with the module (downscaled from 768/512/256, NE=4, C=4).
    B, E, H, Bn, NE, C = 8, 128, 128, 128, 4, 4

    key = jax.random.PRNGKey(0)
    k_x, k_p = jax.random.split(key)
    cls_embedding = jax.random.normal(k_x, (B, E), jnp.float32)
    params = init_params(k_p, E, H, Bn, NE, C)

    # Weight fuse/fold/quantize happens ONCE; the jitted forward is reused across calls.
    packed, meta = pack_params(params)

    class_logits, sentiment_logits = moe_multitask_forward(cls_embedding, packed, meta=meta)
    class_logits = jax.block_until_ready(class_logits)
    sentiment_logits = jax.block_until_ready(sentiment_logits)
    assert class_logits.shape == (B, C) and sentiment_logits.shape == (B, 2)

    # Tight check vs. a reference using the identical bf16-quantized, head-folded operands.
    mc, ms = reference_forward_mirror(cls_embedding, packed, meta)
    assert jnp.allclose(class_logits, mc, atol=2e-3, rtol=2e-3), \
        float(jnp.max(jnp.abs(class_logits - mc)))
    assert jnp.allclose(sentiment_logits, ms, atol=2e-3, rtol=2e-3), \
        float(jnp.max(jnp.abs(sentiment_logits - ms)))

    # Loose check vs. the pure-f32 module semantics (bf16 quantization noise only).
    fc, fs = reference_forward_f32(cls_embedding, params)
    assert jnp.allclose(class_logits, fc, atol=3e-2, rtol=3e-2)
    assert jnp.allclose(sentiment_logits, fs, atol=3e-2, rtol=3e-2)

    print("KERNEL_OK")
</pallas_src>

<mosaic_0001>
module attributes {stable_mosaic.version = 11 : i64} {
  func.func @kernel(%arg0: i32, %arg1: memref<8x128xbf16, #tpu.memory_space<vmem>>, %arg2: memref<128x8xbf16, #tpu.memory_space<vmem>>, %arg3: memref<1x8xf32, #tpu.memory_space<vmem>>, %arg4: memref<128x512xbf16, #tpu.memory_space<vmem>>, %arg5: memref<1x512xf32, #tpu.memory_space<vmem>>, %arg6: memref<4x512xbf16, #tpu.memory_space<vmem>>, %arg7: memref<512x128xbf16, #tpu.memory_space<vmem>>, %arg8: memref<4x128xbf16, #tpu.memory_space<vmem>>, %arg9: memref<1x128xf32, #tpu.memory_space<vmem>>, %arg10: memref<2x8x128xf32, #tpu.memory_space<vmem>>) attributes {dimension_semantics = [#tpu.dimension_semantics<parallel>], iteration_bounds = array<i64: 1>, scalar_prefetch = 0 : i64, scratch_operands = 0 : i64, tpu.core_type = #tpu.core_type<tc>, window_params = [{transform_indices = @transform_0, window_bounds = array<i64: 8, 128>}, {pipeline_mode = #tpu.pipeline_mode<synchronous>, transform_indices = @transform_1, window_bounds = array<i64: 128, 8>}, {pipeline_mode = #tpu.pipeline_mode<synchronous>, transform_indices = @transform_2, window_bounds = array<i64: 1, 8>}, {pipeline_mode = #tpu.pipeline_mode<synchronous>, transform_indices = @transform_3, window_bounds = array<i64: 128, 512>}, {pipeline_mode = #tpu.pipeline_mode<synchronous>, transform_indices = @transform_4, window_bounds = array<i64: 1, 512>}, {pipeline_mode = #tpu.pipeline_mode<synchronous>, transform_indices = @transform_5, window_bounds = array<i64: 4, 512>}, {pipeline_mode = #tpu.pipeline_mode<synchronous>, transform_indices = @transform_6, window_bounds = array<i64: 512, 128>}, {pipeline_mode = #tpu.pipeline_mode<synchronous>, transform_indices = @transform_7, window_bounds = array<i64: 4, 128>}, {pipeline_mode = #tpu.pipeline_mode<synchronous>, transform_indices = @transform_8, window_bounds = array<i64: 1, 128>}, {transform_indices = @transform_9, window_bounds = array<i64: 2, 8, 128>}]} {
    %c0 = arith.constant 0 : index
    %c0_0 = arith.constant 0 : index
    %0 = vector.load %arg1[%c0, %c0_0] : memref<8x128xbf16, #tpu.memory_space<vmem>>, vector<8x128xbf16>
    %c0_1 = arith.constant 0 : index
    %c0_2 = arith.constant 0 : index
    %1 = vector.load %arg2[%c0_1, %c0_2] : memref<128x8xbf16, #tpu.memory_space<vmem>>, vector<128x8xbf16>
    %cst = arith.constant dense<0.000000e+00> : vector<8x8xf32>
    %2 = tpu.matmul %0, %1, %cst {dimension_numbers = #tpu.dot_dimension_numbers<[1], [0], [0], [1], [0, 0, 1, 1], [], []>} : vector<8x128xbf16>, vector<128x8xbf16>, vector<8x8xf32> -> vector<8x8xf32>
    %c0_3 = arith.constant 0 : index
    %c0_4 = arith.constant 0 : index
    %3 = vector.load %arg3[%c0_3, %c0_4] : memref<1x8xf32, #tpu.memory_space<vmem>>, vector<1x8xf32>
    %4 = vector.broadcast %3 : vector<1x8xf32> to vector<8x8xf32>
    %5 = arith.addf %2, %4 : vector<8x8xf32>
    %6 = vector.extract_strided_slice %5 {offsets = [0, 0], sizes = [8, 4], strides = [1, 1]} : vector<8x8xf32> to vector<8x4xf32>
    %cst_5 = arith.constant dense<0xFF800000> : vector<8xf32>
    %7 = vector.multi_reduction <maximumf>, %6, %cst_5 [1] : vector<8x4xf32> to vector<8xf32>
    %8 = vector.shape_cast %7 : vector<8xf32> to vector<8x1xf32>
    %9 = vector.broadcast %8 : vector<8x1xf32> to vector<8x4xf32>
    %10 = arith.subf %6, %9 : vector<8x4xf32>
    %11 = math.exp %10 : vector<8x4xf32>
    %cst_6 = arith.constant dense<0.000000e+00> : vector<8xf32>
    %12 = vector.multi_reduction <add>, %11, %cst_6 [1] : vector<8x4xf32> to vector<8xf32>
    %13 = vector.shape_cast %12 : vector<8xf32> to vector<8x1xf32>
    %14 = tpu.reciprocal %13 {approx = true} : vector<8x1xf32> -> vector<8x1xf32>
    %15 = vector.broadcast %14 : vector<8x1xf32> to vector<8x4xf32>
    %16 = arith.mulf %11, %15 : vector<8x4xf32>
    %17 = vector.extract_strided_slice %5 {offsets = [0, 4], sizes = [8, 4], strides = [1, 1]} : vector<8x8xf32> to vector<8x4xf32>
    %cst_7 = arith.constant dense<0xFF800000> : vector<8xf32>
    %18 = vector.multi_reduction <maximumf>, %17, %cst_7 [1] : vector<8x4xf32> to vector<8xf32>
    %19 = vector.shape_cast %18 : vector<8xf32> to vector<8x1xf32>
    %20 = vector.broadcast %19 : vector<8x1xf32> to vector<8x4xf32>
    %21 = arith.subf %17, %20 : vector<8x4xf32>
    %22 = math.exp %21 : vector<8x4xf32>
    %cst_8 = arith.constant dense<0.000000e+00> : vector<8xf32>
    %23 = vector.multi_reduction <add>, %22, %cst_8 [1] : vector<8x4xf32> to vector<8xf32>
    %24 = vector.shape_cast %23 : vector<8xf32> to vector<8x1xf32>
    %25 = tpu.reciprocal %24 {approx = true} : vector<8x1xf32> -> vector<8x1xf32>
    %26 = vector.broadcast %25 : vector<8x1xf32> to vector<8x4xf32>
    %27 = arith.mulf %22, %26 : vector<8x4xf32>
    %28 = tpu.concatenate %16, %27 in 0 : vector<8x4xf32>, vector<8x4xf32> -> vector<16x4xf32>
    %29 = arith.truncf %28 : vector<16x4xf32> to vector<16x4xbf16>
    %c0_9 = arith.constant 0 : index
    %c0_10 = arith.constant 0 : index
    %30 = vector.load %arg4[%c0_9, %c0_10] : memref<128x512xbf16, #tpu.memory_space<vmem>>, vector<128x512xbf16>
    %cst_11 = arith.constant dense<0.000000e+00> : vector<8x512xf32>
    %31 = tpu.matmul %0, %30, %cst_11 {dimension_numbers = #tpu.dot_dimension_numbers<[1], [0], [0], [1], [0, 0, 1, 1], [], []>} : vector<8x128xbf16>, vector<128x512xbf16>, vector<8x512xf32> -> vector<8x512xf32>
    %c0_12 = arith.constant 0 : index
    %c0_13 = arith.constant 0 : index
    %32 = vector.load %arg5[%c0_12, %c0_13] : memref<1x512xf32, #tpu.memory_space<vmem>>, vector<1x512xf32>
    %33 = vector.broadcast %32 : vector<1x512xf32> to vector<8x512xf32>
    %34 = arith.addf %31, %33 : vector<8x512xf32>
    %cst_14 = arith.constant 0.000000e+00 : f32
    %35 = vector.broadcast %cst_14 : f32 to vector<8x512xf32>
    %36 = arith.maximumf %34, %35 : vector<8x512xf32>
    %c0_15 = arith.constant 0 : index
    %c0_16 = arith.constant 0 : index
    %37 = vector.load %arg6[%c0_15, %c0_16] : memref<4x512xbf16, #tpu.memory_space<vmem>>, vector<4x512xbf16>
    %cst_17 = arith.constant dense<0.000000e+00> : vector<16x512xf32>
    %38 = tpu.matmul %29, %37, %cst_17 {dimension_numbers = #tpu.dot_dimension_numbers<[1], [0], [0], [1], [0, 0, 1, 1], [], []>} : vector<16x4xbf16>, vector<4x512xbf16>, vector<16x512xf32> -> vector<16x512xf32>
    %39 = tpu.concatenate %36, %36 in 0 : vector<8x512xf32>, vector<8x512xf32> -> vector<16x512xf32>
    %40 = arith.mulf %38, %39 : vector<16x512xf32>
    %41 = arith.truncf %40 : vector<16x512xf32> to vector<16x512xbf16>
    %c0_18 = arith.constant 0 : index
    %c0_19 = arith.constant 0 : index
    %42 = vector.load %arg7[%c0_18, %c0_19] : memref<512x128xbf16, #tpu.memory_space<vmem>>, vector<512x128xbf16>
    %cst_20 = arith.constant dense<0.000000e+00> : vector<16x128xf32>
    %43 = tpu.matmul %41, %42, %cst_20 {dimension_numbers = #tpu.dot_dimension_numbers<[1], [0], [0], [1], [0, 0, 1, 1], [], []>} : vector<16x512xbf16>, vector<512x128xbf16>, vector<16x128xf32> -> vector<16x128xf32>
    %c0_21 = arith.constant 0 : index
    %c0_22 = arith.constant 0 : index
    %44 = vector.load %arg8[%c0_21, %c0_22] : memref<4x128xbf16, #tpu.memory_space<vmem>>, vector<4x128xbf16>
    %cst_23 = arith.constant dense<0.000000e+00> : vector<16x128xf32>
    %45 = tpu.matmul %29, %44, %cst_23 {dimension_numbers = #tpu.dot_dimension_numbers<[1], [0], [0], [1], [0, 0, 1, 1], [], []>} : vector<16x4xbf16>, vector<4x128xbf16>, vector<16x128xf32> -> vector<16x128xf32>
    %46 = arith.addf %43, %45 : vector<16x128xf32>
    %c0_24 = arith.constant 0 : index
    %c0_25 = arith.constant 0 : index
    %47 = vector.load %arg9[%c0_24, %c0_25] : memref<1x128xf32, #tpu.memory_space<vmem>>, vector<1x128xf32>
    %48 = vector.broadcast %47 : vector<1x128xf32> to vector<16x128xf32>
    %49 = arith.addf %46, %48 : vector<16x128xf32>
    %50 = vector.extract_strided_slice %49 {offsets = [0, 0], sizes = [8, 128], strides = [1, 1]} : vector<16x128xf32> to vector<8x128xf32>
    %c0_26 = arith.constant 0 : index
    %c0_27 = arith.constant 0 : index
    %c0_28 = arith.constant 0 : index
    %51 = vector.load %arg10[%c0_26, %c0_27, %c0_28] : memref<2x8x128xf32, #tpu.memory_space<vmem>>, vector<1x8x128xf32>
    %52 = vector.shape_cast %51 : vector<1x8x128xf32> to vector<8x128xf32>
    %53 = vector.shape_cast %50 : vector<8x128xf32> to vector<1x8x128xf32>
    tpu.vector_store %arg10[%c0_26, %c0_27, %c0_28], %53 {strides = array<i32>} : memref<2x8x128xf32, #tpu.memory_space<vmem>>, vector<1x8x128xf32>,
    %54 = vector.extract_strided_slice %49 {offsets = [8, 0], sizes = [8, 128], strides = [1, 1]} : vector<16x128xf32> to vector<8x128xf32>
    %c1 = arith.constant 1 : index
    %c0_29 = arith.constant 0 : index
    %c0_30 = arith.constant 0 : index
    %55 = vector.load %arg10[%c1, %c0_29, %c0_30] : memref<2x8x128xf32, #tpu.memory_space<vmem>>, vector<1x8x128xf32>
    %56 = vector.shape_cast %55 : vector<1x8x128xf32> to vector<8x128xf32>
    %57 = vector.shape_cast %54 : vector<8x128xf32> to vector<1x8x128xf32>
    tpu.vector_store %arg10[%c1, %c0_29, %c0_30], %57 {strides = array<i32>} : memref<2x8x128xf32, #tpu.memory_space<vmem>>, vector<1x8x128xf32>,
    return
  }
  func.func @transform_0(%arg0: i32) -> (i32, i32) {
    %c0_i32 = arith.constant 0 : i32
    %c0_i32_0 = arith.constant 0 : i32
    return %arg0, %c0_i32 : i32, i32
  }
  func.func @transform_1(%arg0: i32) -> (i32, i32) {
    %c0_i32 = arith.constant 0 : i32
    %c0_i32_0 = arith.constant 0 : i32
    %c0_i32_1 = arith.constant 0 : i32
    return %c0_i32, %c0_i32_0 : i32, i32
  }
  func.func @transform_2(%arg0: i32) -> (i32, i32) {
    %c0_i32 = arith.constant 0 : i32
    %c0_i32_0 = arith.constant 0 : i32
    %c0_i32_1 = arith.constant 0 : i32
    return %c0_i32, %c0_i32_0 : i32, i32
  }
  func.func @transform_3(%arg0: i32) -> (i32, i32) {
    %c0_i32 = arith.constant 0 : i32
    %c0_i32_0 = arith.constant 0 : i32
    %c0_i32_1 = arith.constant 0 : i32
    return %c0_i32, %c0_i32_0 : i32, i32
  }
  func.func @transform_4(%arg0: i32) -> (i32, i32) {
    %c0_i32 = arith.constant 0 : i32
    %c0_i32_0 = arith.constant 0 : i32
    %c0_i32_1 = arith.constant 0 : i32
    return %c0_i32, %c0_i32_0 : i32, i32
  }
  func.func @transform_5(%arg0: i32) -> (i32, i32) {
    %c0_i32 = arith.constant 0 : i32
    %c0_i32_0 = arith.constant 0 : i32
    %c0_i32_1 = arith.constant 0 : i32
    return %c0_i32, %c0_i32_0 : i32, i32
  }
  func.func @transform_6(%arg0: i32) -> (i32, i32) {
    %c0_i32 = arith.constant 0 : i32
    %c0_i32_0 = arith.constant 0 : i32
    %c0_i32_1 = arith.constant 0 : i32
    return %c0_i32, %c0_i32_0 : i32, i32
  }
  func.func @transform_7(%arg0: i32) -> (i32, i32) {
    %c0_i32 = arith.constant 0 : i32
    %c0_i32_0 = arith.constant 0 : i32
    %c0_i32_1 = arith.constant 0 : i32
    return %c0_i32, %c0_i32_0 : i32, i32
  }
  func.func @transform_8(%arg0: i32) -> (i32, i32) {
    %c0_i32 = arith.constant 0 : i32
    %c0_i32_0 = arith.constant 0 : i32
    %c0_i32_1 = arith.constant 0 : i32
    return %c0_i32, %c0_i32_0 : i32, i32
  }
  func.func @transform_9(%arg0: i32) -> (i32, i32, i32) {
    %c0_i32 = arith.constant 0 : i32
    %c0_i32_0 = arith.constant 0 : i32
    %c0_i32_1 = arith.constant 0 : i32
    return %c0_i32, %arg0, %c0_i32_0 : i32, i32, i32
  }
}

</mosaic_0001>

<llo_original>
// kernel: moe_multitask_forward.1
$region0: #{moe_multitask_forward.1}
  #allocation0 [shape = 'u32[]', space=smem, size = 0x4, offset = 0x4, fixed_abs, tag = 'smem constant byte address 0x4 - core index']
  #allocation1 [shape = 'u32[144,128]{1,0:T(1,128)}', space=vmem, size = 0x12000, scoped, tag = 'internal scratch']
  %s0 = inlined_call_operand.vmem [shape: bf16[8,128], index: 0, kind: input, shape index: {}]
  %s1 = inlined_call_operand.vmem [shape: bf16[128,8], index: 1, kind: input, shape index: {}]
  %s2 = inlined_call_operand.vmem [shape: f32[1,8], index: 2, kind: input, shape index: {}]
  %s3 = inlined_call_operand.hbm [shape: bf16[128,512], index: 3, kind: input, shape index: {}]
  %s4 = inlined_call_operand.vmem [shape: f32[1,512], index: 4, kind: input, shape index: {}]
  %s5 = inlined_call_operand.vmem [shape: bf16[4,512], index: 5, kind: input, shape index: {}]
  %s6 = inlined_call_operand.hbm [shape: bf16[512,128], index: 6, kind: input, shape index: {}]
  %s7 = inlined_call_operand.vmem [shape: bf16[4,128], index: 7, kind: input, shape index: {}]
  %s8 = inlined_call_operand.vmem [shape: f32[1,128], index: 8, kind: input, shape index: {}]
  %s9 = inlined_call_operand.vmem [shape: f32[2,8,128], index: 9, kind: output, shape index: {}]
  %s10 = sld [smem:[#allocation0]]
  $region54: #{moe_multitask_forward.1} parent=0
    _
  %s12 = ssub.s32 1, %s10
  %s13 = scalar_select 0, %s12, %s10
  $region1: #{moe_multitask_forward.1} parent=0
    #allocation2 [shape = 'u8[131072]{0}', space=vmem, size = 0x20000, scoped, tag = 'input window, operand 3, single buffered']
    #allocation3 [shape = 's32[1]{0}', space=sflag, size = 0x4, scoped, tag = 'scoped memory for moe_multitask_forward.1']
    #allocation4 [shape = 'u8[131072]{0}', space=vmem, size = 0x20000, scoped, tag = 'input window, operand 6, single buffered']
    #allocation5 [shape = 's32[1]{0}', space=sflag, size = 0x4, scoped, tag = 'scoped memory for moe_multitask_forward.1']
    %14 = vsyncpa [#allocation3], 0
    %15 = vsyncpa [#allocation5], 0
    // Predicated region
    $region2: #{moe_multitask_forward.1} parent=1 // pred_check
      _
    $region3: #{moe_multitask_forward.1} parent=1 // pred_check_branch
      %17 = sbr.rel (0) target = $region5
    $region4: #{moe_multitask_forward.1} parent=1 // pred_region
      _
    $region5: #{moe_multitask_forward.1} parent=1 // pred_fallthru
      _
    // Predicated region
    $region6: #{moe_multitask_forward.1} parent=1 // pred_check
      _
    $region7: #{moe_multitask_forward.1} parent=1 // pred_check_branch
      %19 = sbr.rel (0) target = $region9
    $region8: #{moe_multitask_forward.1} parent=1 // pred_region
      _
    $region9: #{moe_multitask_forward.1} parent=1 // pred_fallthru
      _
    // Predicated region
    $region10: #{moe_multitask_forward.1} parent=1 // pred_check
      _
    $region11: #{moe_multitask_forward.1} parent=1 // pred_check_branch
      %21 = sbr.rel (0) target = $region13
    $region12: #{moe_multitask_forward.1} parent=1 // pred_region
      _
    $region13: #{moe_multitask_forward.1} parent=1 // pred_fallthru
      _
    // Predicated region
    $region14: #{moe_multitask_forward.1} parent=1 // pred_check
      _
    $region15: #{moe_multitask_forward.1} parent=1 // pred_check_branch
      %23 = sbr.rel (0) target = $region17
    $region16: #{moe_multitask_forward.1} parent=1 // pred_region
      %s25 = ssub.s32 4096, 4096
      %26 = vsyncadd [#allocation3], %s25
      %s27 = sshll.u32 [#allocation2], 4
      %s28 = int_to_ptr.vmem [resolvable:$true] %s27
      %33 = dma.hbm_to_vmem [thread:$0]  %s3, 4096, %s28, [#allocation3], 256, 256, 16
    $region17: #{moe_multitask_forward.1} parent=1 // pred_fallthru
      _
    // Predicated region
    $region18: #{moe_multitask_forward.1} parent=1 // pred_check
      _
    $region19: #{moe_multitask_forward.1} parent=1 // pred_check_branch
      %35 = sbr.rel (0) target = $region21
    $region20: #{moe_multitask_forward.1} parent=1 // pred_region
      _
    $region21: #{moe_multitask_forward.1} parent=1 // pred_fallthru
      _
    // Predicated region
    $region22: #{moe_multitask_forward.1} parent=1 // pred_check
      _
    $region23: #{moe_multitask_forward.1} parent=1 // pred_check_branch
      %37 = sbr.rel (0) target = $region25
    $region24: #{moe_multitask_forward.1} parent=1 // pred_region
      _
    $region25: #{moe_multitask_forward.1} parent=1 // pred_fallthru
      _
    // Predicated region
    $region26: #{moe_multitask_forward.1} parent=1 // pred_check
      _
    $region27: #{moe_multitask_forward.1} parent=1 // pred_check_branch
      %39 = sbr.rel (0) target = $region29
    $region28: #{moe_multitask_forward.1} parent=1 // pred_region
      %s41 = ssub.s32 4096, 4096
      %42 = vsyncadd [#allocation5], %s41
      %s43 = sshll.u32 [#allocation4], 4
      %s44 = int_to_ptr.vmem [resolvable:$true] %s43
      %49 = dma.hbm_to_vmem [thread:$0]  %s6, 4096, %s44, [#allocation5], 64, 64, 4
    $region29: #{moe_multitask_forward.1} parent=1 // pred_fallthru
      _
    // Predicated region
    $region30: #{moe_multitask_forward.1} parent=1 // pred_check
      _
    $region31: #{moe_multitask_forward.1} parent=1 // pred_check_branch
      %51 = sbr.rel (0) target = $region33
    $region32: #{moe_multitask_forward.1} parent=1 // pred_region
      _
    $region33: #{moe_multitask_forward.1} parent=1 // pred_fallthru
      _
    // Predicated region
    $region34: #{moe_multitask_forward.1} parent=1 // pred_check
      _
    $region35: #{moe_multitask_forward.1} parent=1 // pred_check_branch
      %53 = sbr.rel (0) target = $region37
    $region36: #{moe_multitask_forward.1} parent=1 // pred_region
      _
    $region37: #{moe_multitask_forward.1} parent=1 // pred_fallthru
      _
    // Predicated region
    $region38: #{moe_multitask_forward.1} parent=1 // pred_check
      _
    $region39: #{moe_multitask_forward.1} parent=1 // pred_check_branch
      %55 = sbr.rel (0) target = $region41
    $region40: #{moe_multitask_forward.1} parent=1 // pred_region
      %56 = dma.done [#allocation3], 4096
    $region41: #{moe_multitask_forward.1} parent=1 // pred_fallthru
      _
    // Predicated region
    $region42: #{moe_multitask_forward.1} parent=1 // pred_check
      _
    $region43: #{moe_multitask_forward.1} parent=1 // pred_check_branch
      %58 = sbr.rel (0) target = $region45
    $region44: #{moe_multitask_forward.1} parent=1 // pred_region
      %59 = dma.done [#allocation5], 4096
    $region45: #{moe_multitask_forward.1} parent=1 // pred_fallthru
      _
    %v61 = vld [vmem:[%s0] sm:$0xf]
    %v62 = vld [vmem:[%s1] sm:$0xf]
    %v63 = vld [vmem:[%s1 + $0x4] sm:$0xf]
    %v64 = vld [vmem:[%s1 + $0x8] sm:$0xf]
    %v65 = vld [vmem:[%s1 + $0xc] sm:$0xf]
    %v66 = vld [vmem:[%s1 + $0x10] sm:$0xf]
    %v67 = vld [vmem:[%s1 + $0x14] sm:$0xf]
    %v68 = vld [vmem:[%s1 + $0x18] sm:$0xf]
    %v69 = vld [vmem:[%s1 + $0x1c] sm:$0xf]
    %v70 = vld [vmem:[%s1 + $0x20] sm:$0xf]
    %v71 = vld [vmem:[%s1 + $0x24] sm:$0xf]
    %v72 = vld [vmem:[%s1 + $0x28] sm:$0xf]
    %v73 = vld [vmem:[%s1 + $0x2c] sm:$0xf]
    %v74 = vld [vmem:[%s1 + $0x30] sm:$0xf]
    %v75 = vld [vmem:[%s1 + $0x34] sm:$0xf]
    %v76 = vld [vmem:[%s1 + $0x38] sm:$0xf]
    %v77 = vld [vmem:[%s1 + $0x3c] sm:$0xf]
    %v78 = vld [vmem:[%s2] sm:$0x1]
    %v80 = vlaneseq
    %v81 = vshrl.u32 %v80, 7
    %v82 = vsub.s32 0, %v81
    %v83 = vrot.slane %v78, %v82
    %v101 = vunpack.c.l.b16 %v62
    %v102 = vunpack.c.l.b16 %v63
    %v103 = vunpack.c.l.b16 %v64
    %v104 = vunpack.c.l.b16 %v65
    %v105 = vunpack.c.l.b16 %v66
    %v106 = vunpack.c.l.b16 %v67
    %v107 = vunpack.c.l.b16 %v68
    %v108 = vunpack.c.l.b16 %v69
    %v109 = vunpack.c.l.b16 %v70
    %v110 = vunpack.c.l.b16 %v71
    %v111 = vunpack.c.l.b16 %v72
    %v112 = vunpack.c.l.b16 %v73
    %v113 = vunpack.c.l.b16 %v74
    %v114 = vunpack.c.l.b16 %v75
    %v115 = vunpack.c.l.b16 %v76
    %v116 = vunpack.c.l.b16 %v77
    %v117 = vpack.c.b16 %v102, %v101
    %v118 = vpack.c.b16 %v104, %v103
    %v119 = vpack.c.b16 %v106, %v105
    %v120 = vpack.c.b16 %v108, %v107
    %v121 = vpack.c.b16 %v110, %v109
    %v122 = vpack.c.b16 %v112, %v111
    %v123 = vpack.c.b16 %v114, %v113
    %v124 = vpack.c.b16 %v116, %v115
    %133 = vmatprep.subr.bf16.mxu0 0
    %134 = vmatpush1.bf16.msra.mxu0 %v117
    %135 = vmatprep.subr.bf16.mxu0 0
    %136 = vmatpush1.bf16.msra.mxu0 %v118
    %137 = vmatprep.subr.bf16.mxu0 0
    %138 = vmatpush1.bf16.msra.mxu0 %v119
    %139 = vmatprep.subr.bf16.mxu0 0
    %140 = vmatpush1.bf16.msra.mxu0 %v120
    %141 = vmatprep.subr.bf16.mxu0 0
    %142 = vmatpush1.bf16.msra.mxu0 %v121
    %143 = vmatprep.subr.bf16.mxu0 0
    %144 = vmatpush1.bf16.msra.mxu0 %v122
    %145 = vmatprep.subr.bf16.mxu0 0
    %146 = vmatpush1.bf16.msra.mxu0 %v123
    %147 = vmatprep.subr.bf16.mxu0 0
    %148 = vmatpush1.bf16.msra.mxu0 %v124
    %149 = vmatprep.subr.bf16.mxu0 0
    %150 = vmatpush1.bf16.msra.mxu0 0
    %151 = vmatprep.subr.bf16.mxu0 0
    %152 = vmatpush1.bf16.msra.mxu0 0
    %153 = vmatprep.subr.bf16.mxu0 0
    %154 = vmatpush1.bf16.msra.mxu0 0
    %155 = vmatprep.subr.bf16.mxu0 0
    %156 = vmatpush1.bf16.msra.mxu0 0
    %157 = vmatprep.subr.bf16.mxu0 0
    %158 = vmatpush1.bf16.msra.mxu0 0
    %159 = vmatprep.subr.bf16.mxu0 0
    %160 = vmatpush1.bf16.msra.mxu0 0
    %161 = vmatprep.subr.bf16.mxu0 0
    %162 = vmatpush1.bf16.msra.mxu0 0
    %163 = vmatprep.subr.bf16.mxu0 0
    %164 = vmatpush1.bf16.msra.mxu0 0
    %165 = vmatprep.mubr.bf16.mxu0 0
    %166 = vmatmul.mubr.bf16.gmra.mrb[0].mxu0 %v61
    %v167 = vpop.f32.mrb[0].mxu0
    %v168 = vadd.f32 %v83, %v167
    %v169 = vpop.f32.mrb[0].mxu0
    %v170 = vpop.f32.mrb[0].mxu0
    %v171 = vpop.f32.mrb[0].mxu0
    %172 = vdwg.mxu0
    %vm173 = vcmask 31744
    %v174 = vsel %vm173, %v168, -inf
    %175 = vmax.xlane.f32.xlu0 %v174
    %v176 = vpop.xlane.xlu0 %175
    %v177 = vsub.f32 %v168, %v176
    %v178 = vmul.f32 %v177, 1.442695
    %v179 = vpow.pop %v178
    %v180 = vsel %vm173, %v179, 0.0
    %181 = vadd.xlane.f32.xlu0 %v180
    %v182 = vpop.xlane.xlu0 %181
    %v183 = vrcp.pop %v182
    %v184 = vmul.f32 %v179, %v183
    %vm185 = vcmask 64544
    %v186 = vsel %vm185, %v168, -inf
    %187 = vmax.xlane.f32.xlu0 %v186
    %v188 = vpop.xlane.xlu0 %187
    %v189 = vsub.f32 %v168, %v188
    %v190 = vmul.f32 %v189, 1.442695
    %v191 = vpow.pop %v190
    %193 = vrot.lane.b32.xlu0 %v191, 124
    %v194 = vpop.permute.xlu0 %193
    %v196 = vsel %vm173, %v194, 0.0
    %197 = vadd.xlane.f32.xlu0 %v196
    %v198 = vpop.xlane.xlu0 %197
    %v199 = vrcp.pop %v198
    %v200 = vmul.f32 %v191, %v199
    %202 = vrot.lane.b32.xlu0 %v200, 124
    %v203 = vpop.permute.xlu0 %202
    %v205 = vpack.c.bf16 %v203, %v184
    %v206 = vld [vmem:[#allocation2] sm:$0xff]
    %v207 = vld [vmem:[#allocation2 + $0x8] sm:$0xff]
    %v208 = vld [vmem:[#allocation2 + $0x10] sm:$0xff]
    %v209 = vld [vmem:[#allocation2 + $0x18] sm:$0xff]
    %v210 = vld [vmem:[#allocation2 + $0x20] sm:$0xff]
    %v211 = vld [vmem:[#allocation2 + $0x28] sm:$0xff]
    %v212 = vld [vmem:[#allocation2 + $0x30] sm:$0xff]
    %v213 = vld [vmem:[#allocation2 + $0x38] sm:$0xff]
    %v214 = vld [vmem:[#allocation2 + $0x40] sm:$0xff]
    %v215 = vld [vmem:[#allocation2 + $0x48] sm:$0xff]
    %v216 = vld [vmem:[#allocation2 + $0x50] sm:$0xff]
    %v217 = vld [vmem:[#allocation2 + $0x58] sm:$0xff]
    %v218 = vld [vmem:[#allocation2 + $0x60] sm:$0xff]
    %v219 = vld [vmem:[#allocation2 + $0x68] sm:$0xff]
    %v220 = vld [vmem:[#allocation2 + $0x70] sm:$0xff]
    %v221 = vld [vmem:[#allocation2 + $0x78] sm:$0xff]
    %v222 = vld [vmem:[#allocation2 + $0x80] sm:$0xff]
    %v223 = vld [vmem:[#allocation2 + $0x88] sm:$0xff]
    %v224 = vld [vmem:[#allocation2 + $0x90] sm:$0xff]
    %v225 = vld [vmem:[#allocation2 + $0x98] sm:$0xff]
    %v226 = vld [vmem:[#allocation2 + $0xa0] sm:$0xff]
    %v227 = vld [vmem:[#allocation2 + $0xa8] sm:$0xff]
    %v228 = vld [vmem:[#allocation2 + $0xb0] sm:$0xff]
    %v229 = vld [vmem:[#allocation2 + $0xb8] sm:$0xff]
    %v230 = vld [vmem:[#allocation2 + $0xc0] sm:$0xff]
    %v231 = vld [vmem:[#allocation2 + $0xc8] sm:$0xff]
    %v232 = vld [vmem:[#allocation2 + $0xd0] sm:$0xff]
    %v233 = vld [vmem:[#allocation2 + $0xd8] sm:$0xff]
    %v234 = vld [vmem:[#allocation2 + $0xe0] sm:$0xff]
    %v235 = vld [vmem:[#allocation2 + $0xe8] sm:$0xff]
    %v236 = vld [vmem:[#allocation2 + $0xf0] sm:$0xff]
    %v237 = vld [vmem:[#allocation2 + $0xf8] sm:$0xff]
    %v238 = vld [vmem:[%s4] sm:$0xf]
    %v240 = vlaneseq
    %v241 = vshrl.u32 %v240, 7
    %v242 = vsub.s32 0, %v241
    %v243 = vrot.slane %v238, %v242
    %v244 = vlaneseq
    %v245 = vshrl.u32 %v244, 7
    %v246 = vsub.s32 1, %v245
    %v247 = vrot.slane %v238, %v246
    %v248 = vlaneseq
    %v249 = vshrl.u32 %v248, 7
    %v250 = vsub.s32 2, %v249
    %v251 = vrot.slane %v238, %v250
    %v252 = vlaneseq
    %v253 = vshrl.u32 %v252, 7
    %v254 = vsub.s32 3, %v253
    %v255 = vrot.slane %v238, %v254
    %v292 = vunpack.c.l.b16 %v206
    %v293 = vunpack.c.h.b16 %v206
    %v294 = vunpack.c.l.b16 %v207
    %v295 = vunpack.c.h.b16 %v207
    %v296 = vunpack.c.l.b16 %v208
    %v297 = vunpack.c.h.b16 %v208
    %v298 = vunpack.c.l.b16 %v209
    %v299 = vunpack.c.h.b16 %v209
    %v300 = vunpack.c.l.b16 %v210
    %v301 = vunpack.c.h.b16 %v210
    %v302 = vunpack.c.l.b16 %v211
    %v303 = vunpack.c.h.b16 %v211
    %v304 = vunpack.c.l.b16 %v212
    %v305 = vunpack.c.h.b16 %v212
    %v306 = vunpack.c.l.b16 %v213
    %v307 = vunpack.c.h.b16 %v213
    %v308 = vunpack.c.l.b16 %v214
    %v309 = vunpack.c.h.b16 %v214
    %v310 = vunpack.c.l.b16 %v215
    %v311 = vunpack.c.h.b16 %v215
    %v312 = vunpack.c.l.b16 %v216
    %v313 = vunpack.c.h.b16 %v216
    %v314 = vunpack.c.l.b16 %v217
    %v315 = vunpack.c.h.b16 %v217
    %v316 = vunpack.c.l.b16 %v218
    %v317 = vunpack.c.h.b16 %v218
    %v318 = vunpack.c.l.b16 %v219
    %v319 = vunpack.c.h.b16 %v219
    %v320 = vunpack.c.l.b16 %v220
    %v321 = vunpack.c.h.b16 %v220
    %v322 = vunpack.c.l.b16 %v221
    %v323 = vunpack.c.h.b16 %v221
    %v324 = vunpack.c.l.b16 %v222
    %v325 = vunpack.c.h.b16 %v222
    %v326 = vunpack.c.l.b16 %v223
    %v327 = vunpack.c.h.b16 %v223
    %v328 = vunpack.c.l.b16 %v224
    %v329 = vunpack.c.h.b16 %v224
    %v330 = vunpack.c.l.b16 %v225
    %v331 = vunpack.c.h.b16 %v225
    %v332 = vunpack.c.l.b16 %v226
    %v333 = vunpack.c.h.b16 %v226
    %v334 = vunpack.c.l.b16 %v227
    %v335 = vunpack.c.h.b16 %v227
    %v336 = vunpack.c.l.b16 %v228
    %v337 = vunpack.c.h.b16 %v228
    %v338 = vunpack.c.l.b16 %v229
    %v339 = vunpack.c.h.b16 %v229
    %v340 = vunpack.c.l.b16 %v230
    %v341 = vunpack.c.h.b16 %v230
    %v342 = vunpack.c.l.b16 %v231
    %v343 = vunpack.c.h.b16 %v231
    %v344 = vunpack.c.l.b16 %v232
    %v345 = vunpack.c.h.b16 %v232
    %v346 = vunpack.c.l.b16 %v233
    %v347 = vunpack.c.h.b16 %v233
    %v348 = vunpack.c.l.b16 %v234
    %v349 = vunpack.c.h.b16 %v234
    %v350 = vunpack.c.l.b16 %v235
    %v351 = vunpack.c.h.b16 %v235
    %v352 = vunpack.c.l.b16 %v236
    %v353 = vunpack.c.h.b16 %v236
    %v354 = vunpack.c.l.b16 %v237
    %v355 = vunpack.c.h.b16 %v237
    %v356 = vpack.c.b16 %v296, %v292
    %v357 = vpack.c.b16 %v297, %v293
    %v358 = vpack.c.b16 %v298, %v294
    %v359 = vpack.c.b16 %v299, %v295
    %v360 = vpack.c.b16 %v304, %v300
    %v361 = vpack.c.b16 %v305, %v301
    %v362 = vpack.c.b16 %v306, %v302
    %v363 = vpack.c.b16 %v307, %v303
    %v364 = vpack.c.b16 %v312, %v308
    %v365 = vpack.c.b16 %v313, %v309
    %v366 = vpack.c.b16 %v314, %v310
    %v367 = vpack.c.b16 %v315, %v311
    %v368 = vpack.c.b16 %v320, %v316
    %v369 = vpack.c.b16 %v321, %v317
    %v370 = vpack.c.b16 %v322, %v318
    %v371 = vpack.c.b16 %v323, %v319
    %v372 = vpack.c.b16 %v328, %v324
    %v373 = vpack.c.b16 %v329, %v325
    %v374 = vpack.c.b16 %v330, %v326
    %v375 = vpack.c.b16 %v331, %v327
    %v376 = vpack.c.b16 %v336, %v332
    %v377 = vpack.c.b16 %v337, %v333
    %v378 = vpack.c.b16 %v338, %v334
    %v379 = vpack.c.b16 %v339, %v335
    %v380 = vpack.c.b16 %v344, %v340
    %v381 = vpack.c.b16 %v345, %v341
    %v382 = vpack.c.b16 %v346, %v342
    %v383 = vpack.c.b16 %v347, %v343
    %v384 = vpack.c.b16 %v352, %v348
    %v385 = vpack.c.b16 %v353, %v349
    %v386 = vpack.c.b16 %v354, %v350
    %v387 = vpack.c.b16 %v355, %v351
    %420 = vmatprep.subr.bf16.mxu0 %v357
    %421 = vmatpush1.bf16.msra.mxu0 %v356
    %422 = vmatprep.subr.bf16.mxu0 %v361
    %423 = vmatpush1.bf16.msra.mxu0 %v360
    %424 = vmatprep.subr.bf16.mxu0 %v365
    %425 = vmatpush1.bf16.msra.mxu0 %v364
    %426 = vmatprep.subr.bf16.mxu0 %v369
    %427 = vmatpush1.bf16.msra.mxu0 %v368
    %428 = vmatprep.subr.bf16.mxu0 %v373
    %429 = vmatpush1.bf16.msra.mxu0 %v372
    %430 = vmatprep.subr.bf16.mxu0 %v377
    %431 = vmatpush1.bf16.msra.mxu0 %v376
    %432 = vmatprep.subr.bf16.mxu0 %v381
    %433 = vmatpush1.bf16.msra.mxu0 %v380
    %434 = vmatprep.subr.bf16.mxu0 %v385
    %435 = vmatpush1.bf16.msra.mxu0 %v384
    %436 = vmatprep.subr.bf16.mxu0 0
    %437 = vmatpush1.bf16.msra.mxu0 0
    %438 = vmatprep.subr.bf16.mxu0 0
    %439 = vmatpush1.bf16.msra.mxu0 0
    %440 = vmatprep.subr.bf16.mxu0 0
    %441 = vmatpush1.bf16.msra.mxu0 0
    %442 = vmatprep.subr.bf16.mxu0 0
    %443 = vmatpush1.bf16.msra.mxu0 0
    %444 = vmatprep.subr.bf16.mxu0 0
    %445 = vmatpush1.bf16.msra.mxu0 0
    %446 = vmatprep.subr.bf16.mxu0 0
    %447 = vmatpush1.bf16.msra.mxu0 0
    %448 = vmatprep.subr.bf16.mxu0 0
    %449 = vmatpush1.bf16.msra.mxu0 0
    %450 = vmatprep.subr.bf16.mxu0 0
    %451 = vmatpush1.bf16.msra.mxu0 0
    %452 = vmatprep.mubr.bf16.mxu0 0
    %453 = vmatmul.mubr.bf16.gmra.mrb[0].mxu0 %v61
    %v454 = vpop.f32.mrb[0].mxu0
    %v455 = vadd.f32 %v243, %v454
    %v456 = vpop.f32.mrb[0].mxu0
    %v457 = vadd.f32 %v247, %v456
    %v458 = vpop.f32.mrb[0].mxu0
    %v459 = vpop.f32.mrb[0].mxu0
    %460 = vdwg.mxu0
    %461 = vmatprep.subr.bf16.mxu0 %v359
    %462 = vmatpush1.bf16.msra.mxu0 %v358
    %463 = vmatprep.subr.bf16.mxu0 %v363
    %464 = vmatpush1.bf16.msra.mxu0 %v362
    %465 = vmatprep.subr.bf16.mxu0 %v367
    %466 = vmatpush1.bf16.msra.mxu0 %v366
    %467 = vmatprep.subr.bf16.mxu0 %v371
    %468 = vmatpush1.bf16.msra.mxu0 %v370
    %469 = vmatprep.subr.bf16.mxu0 %v375
    %470 = vmatpush1.bf16.msra.mxu0 %v374
    %471 = vmatprep.subr.bf16.mxu0 %v379
    %472 = vmatpush1.bf16.msra.mxu0 %v378
    %473 = vmatprep.subr.bf16.mxu0 %v383
    %474 = vmatpush1.bf16.msra.mxu0 %v382
    %475 = vmatprep.subr.bf16.mxu0 %v387
    %476 = vmatpush1.bf16.msra.mxu0 %v386
    %477 = vmatprep.subr.bf16.mxu0 0
    %478 = vmatpush1.bf16.msra.mxu0 0
    %479 = vmatprep.subr.bf16.mxu0 0
    %480 = vmatpush1.bf16.msra.mxu0 0
    %481 = vmatprep.subr.bf16.mxu0 0
    %482 = vmatpush1.bf16.msra.mxu0 0
    %483 = vmatprep.subr.bf16.mxu0 0
    %484 = vmatpush1.bf16.msra.mxu0 0
    %485 = vmatprep.subr.bf16.mxu0 0
    %486 = vmatpush1.bf16.msra.mxu0 0
    %487 = vmatprep.subr.bf16.mxu0 0
    %488 = vmatpush1.bf16.msra.mxu0 0
    %489 = vmatprep.subr.bf16.mxu0 0
    %490 = vmatpush1.bf16.msra.mxu0 0
    %491 = vmatprep.subr.bf16.mxu0 0
    %492 = vmatpush1.bf16.msra.mxu0 0
    %493 = vmatprep.mubr.bf16.mxu0 0
    %494 = vmatmul.mubr.bf16.gmra.mrb[0].mxu0 %v61
    %v495 = vpop.f32.mrb[0].mxu0
    %v496 = vadd.f32 %v251, %v495
    %v497 = vpop.f32.mrb[0].mxu0
    %v498 = vadd.f32 %v255, %v497
    %v499 = vpop.f32.mrb[0].mxu0
    %v500 = vpop.f32.mrb[0].mxu0
    %501 = vdwg.mxu0
    %v502 = vmax.f32 %v455, 0.0
    %v503 = vmax.f32 %v457, 0.0
    %v504 = vmax.f32 %v496, 0.0
    %v505 = vmax.f32 %v498, 0.0
    %v506 = vld [vmem:[%s5] sm:$0xff]
    %v508 = vcombine.high %v506, %v506
    %v510 = vunpack.c.l.s4 1983009808
    %v511 = vunpack.c.0.s8 %v510
    %v512 = vlaneseq
    %v513 = vshrl.u32 %v512, 7
    %v514 = vsub.s32 %v511, %v513
    %v515 = vrot.slane %v506, %v514
    %v517 = vunpack.c.l.s4 1983009808
    %v518 = vunpack.c.0.s8 %v517
    %v519 = vlaneseq
    %v520 = vshrl.u32 %v519, 7
    %v521 = vsub.s32 %v518, %v520
    %v522 = vrot.slane %v508, %v521
    %v523 = vcombine.high %v515, %v515
    %v524 = vcombine.high %v522, %v522
    %v526 = vsel %vm173, %v205, 0
    %vm528 = vcmask 1041408
    %v530 = vsel %vm528, %v515, 0
    %v533 = vsel %vm528, %v523, 0
    %v536 = vsel %vm528, %v522, 0
    %v539 = vsel %vm528, %v524, 0
    %541 = vmatprep.subr.bf16.mxu0 %v533
    %542 = vmatpush1.bf16.msra.mxu0 %v530
    %543 = vmatprep.subr.bf16.mxu0 0
    %544 = vmatpush1.bf16.msra.mxu0 0
    %545 = vmatprep.subr.bf16.mxu0 0
    %546 = vmatpush1.bf16.msra.mxu0 0
    %547 = vmatprep.subr.bf16.mxu0 0
    %548 = vmatpush1.bf16.msra.mxu0 0
    %549 = vmatprep.subr.bf16.mxu0 0
    %550 = vmatpush1.bf16.msra.mxu0 0
    %551 = vmatprep.subr.bf16.mxu0 0
    %552 = vmatpush1.bf16.msra.mxu0 0
    %553 = vmatprep.subr.bf16.mxu0 0
    %554 = vmatpush1.bf16.msra.mxu0 0
    %555 = vmatprep.subr.bf16.mxu0 0
    %556 = vmatpush1.bf16.msra.mxu0 0
    %557 = vmatprep.subr.bf16.mxu0 0
    %558 = vmatpush1.bf16.msra.mxu0 0
    %559 = vmatprep.subr.bf16.mxu0 0
    %560 = vmatpush1.bf16.msra.mxu0 0
    %561 = vmatprep.subr.bf16.mxu0 0
    %562 = vmatpush1.bf16.msra.mxu0 0
    %563 = vmatprep.subr.bf16.mxu0 0
    %564 = vmatpush1.bf16.msra.mxu0 0
    %565 = vmatprep.subr.bf16.mxu0 0
    %566 = vmatpush1.bf16.msra.mxu0 0
    %567 = vmatprep.subr.bf16.mxu0 0
    %568 = vmatpush1.bf16.msra.mxu0 0
    %569 = vmatprep.subr.bf16.mxu0 0
    %570 = vmatpush1.bf16.msra.mxu0 0
    %571 = vmatprep.subr.bf16.mxu0 0
    %572 = vmatpush1.bf16.msra.mxu0 0
    %573 = vmatprep.mubr.bf16.mxu0 0
    %574 = vmatmul.mubr.bf16.gmra.mrb[0].mxu0 %v526
    %v575 = vpop.f32.mrb[0].mxu0
    %v576 = vadd.f32 0.0, %v575
    %v577 = vpop.f32.mrb[0].mxu0
    %v578 = vadd.f32 0.0, %v577
    %v579 = vpop.f32.mrb[0].mxu0
    %v580 = vadd.f32 0.0, %v579
    %v581 = vpop.f32.mrb[0].mxu0
    %v582 = vadd.f32 0.0, %v581
    %583 = vdwg.mxu0
    %584 = vmatprep.subr.bf16.mxu0 %v539
    %585 = vmatpush1.bf16.msra.mxu0 %v536
    %586 = vmatprep.subr.bf16.mxu0 0
    %587 = vmatpush1.bf16.msra.mxu0 0
    %588 = vmatprep.subr.bf16.mxu0 0
    %589 = vmatpush1.bf16.msra.mxu0 0
    %590 = vmatprep.subr.bf16.mxu0 0
    %591 = vmatpush1.bf16.msra.mxu0 0
    %592 = vmatprep.subr.bf16.mxu0 0
    %593 = vmatpush1.bf16.msra.mxu0 0
    %594 = vmatprep.subr.bf16.mxu0 0
    %595 = vmatpush1.bf16.msra.mxu0 0
    %596 = vmatprep.subr.bf16.mxu0 0
    %597 = vmatpush1.bf16.msra.mxu0 0
    %598 = vmatprep.subr.bf16.mxu0 0
    %599 = vmatpush1.bf16.msra.mxu0 0
    %600 = vmatprep.subr.bf16.mxu0 0
    %601 = vmatpush1.bf16.msra.mxu0 0
    %602 = vmatprep.subr.bf16.mxu0 0
    %603 = vmatpush1.bf16.msra.mxu0 0
    %604 = vmatprep.subr.bf16.mxu0 0
    %605 = vmatpush1.bf16.msra.mxu0 0
    %606 = vmatprep.subr.bf16.mxu0 0
    %607 = vmatpush1.bf16.msra.mxu0 0
    %608 = vmatprep.subr.bf16.mxu0 0
    %609 = vmatpush1.bf16.msra.mxu0 0
    %610 = vmatprep.subr.bf16.mxu0 0
    %611 = vmatpush1.bf16.msra.mxu0 0
    %612 = vmatprep.subr.bf16.mxu0 0
    %613 = vmatpush1.bf16.msra.mxu0 0
    %614 = vmatprep.subr.bf16.mxu0 0
    %615 = vmatpush1.bf16.msra.mxu0 0
    %616 = vmatprep.mubr.bf16.mxu0 0
    %617 = vmatmul.mubr.bf16.gmra.mrb[0].mxu0 %v526
    %v618 = vpop.f32.mrb[0].mxu0
    %v619 = vadd.f32 0.0, %v618
    %v620 = vpop.f32.mrb[0].mxu0
    %v621 = vadd.f32 0.0, %v620
    %v622 = vpop.f32.mrb[0].mxu0
    %v623 = vadd.f32 0.0, %v622
    %v624 = vpop.f32.mrb[0].mxu0
    %v625 = vadd.f32 0.0, %v624
    %626 = vdwg.mxu0
    %v627 = vmul.f32 %v576, %v502
    %v628 = vmul.f32 %v578, %v503
    %v629 = vmul.f32 %v619, %v504
    %v630 = vmul.f32 %v621, %v505
    %v631 = vmul.f32 %v580, %v502
    %v632 = vmul.f32 %v582, %v503
    %v633 = vmul.f32 %v623, %v504
    %v634 = vmul.f32 %v625, %v505
    %v635 = vpack.c.bf16 %v631, %v627
    %v636 = vpack.c.bf16 %v632, %v628
    %v637 = vpack.c.bf16 %v633, %v629
    %v638 = vpack.c.bf16 %v634, %v630
    %v639 = vld [vmem:[#allocation4] sm:$0xf]
    %v640 = vld [vmem:[#allocation4 + $0x4] sm:$0xf]
    %v641 = vld [vmem:[#allocation4 + $0x8] sm:$0xf]
    %v642 = vld [vmem:[#allocation4 + $0xc] sm:$0xf]
    %v643 = vld [vmem:[#allocation4 + $0x10] sm:$0xf]
    %v644 = vld [vmem:[#allocation4 + $0x14] sm:$0xf]
    %v645 = vld [vmem:[#allocation4 + $0x18] sm:$0xf]
    %v646 = vld [vmem:[#allocation4 + $0x1c] sm:$0xf]
    %v647 = vld [vmem:[#allocation4 + $0x20] sm:$0xf]
    %v648 = vld [vmem:[#allocation4 + $0x24] sm:$0xf]
    %v649 = vld [vmem:[#allocation4 + $0x28] sm:$0xf]
    %v650 = vld [vmem:[#allocation4 + $0x2c] sm:$0xf]
    %v651 = vld [vmem:[#allocation4 + $0x30] sm:$0xf]
    %v652 = vld [vmem:[#allocation4 + $0x34] sm:$0xf]
    %v653 = vld [vmem:[#allocation4 + $0x38] sm:$0xf]
    %v654 = vld [vmem:[#allocation4 + $0x3c] sm:$0xf]
    %v655 = vld [vmem:[#allocation4 + $0x40] sm:$0xf]
    %v656 = vld [vmem:[#allocation4 + $0x44] sm:$0xf]
    %v657 = vld [vmem:[#allocation4 + $0x48] sm:$0xf]
    %v658 = vld [vmem:[#allocation4 + $0x4c] sm:$0xf]
    %v659 = vld [vmem:[#allocation4 + $0x50] sm:$0xf]
    %v660 = vld [vmem:[#allocation4 + $0x54] sm:$0xf]
    %v661 = vld [vmem:[#allocation4 + $0x58] sm:$0xf]
    %v662 = vld [vmem:[#allocation4 + $0x5c] sm:$0xf]
    %v663 = vld [vmem:[#allocation4 + $0x60] sm:$0xf]
    %v664 = vld [vmem:[#allocation4 + $0x64] sm:$0xf]
    %v665 = vld [vmem:[#allocation4 + $0x68] sm:$0xf]
    %v666 = vld [vmem:[#allocation4 + $0x6c] sm:$0xf]
    %v667 = vld [vmem:[#allocation4 + $0x70] sm:$0xf]
    %v668 = vld [vmem:[#allocation4 + $0x74] sm:$0xf]
    %v669 = vld [vmem:[#allocation4 + $0x78] sm:$0xf]
    %v670 = vld [vmem:[#allocation4 + $0x7c] sm:$0xf]
    %v671 = vld [vmem:[#allocation4 + $0x80] sm:$0xf]
    %v672 = vld [vmem:[#allocation4 + $0x84] sm:$0xf]
    %v673 = vld [vmem:[#allocation4 + $0x88] sm:$0xf]
    %v674 = vld [vmem:[#allocation4 + $0x8c] sm:$0xf]
    %v675 = vld [vmem:[#allocation4 + $0x90] sm:$0xf]
    %v676 = vld [vmem:[#allocation4 + $0x94] sm:$0xf]
    %v677 = vld [vmem:[#allocation4 + $0x98] sm:$0xf]
    %v678 = vld [vmem:[#allocation4 + $0x9c] sm:$0xf]
    %v679 = vld [vmem:[#allocation4 + $0xa0] sm:$0xf]
    %v680 = vld [vmem:[#allocation4 + $0xa4] sm:$0xf]
    %v681 = vld [vmem:[#allocation4 + $0xa8] sm:$0xf]
    %v682 = vld [vmem:[#allocation4 + $0xac] sm:$0xf]
    %v683 = vld [vmem:[#allocation4 + $0xb0] sm:$0xf]
    %v684 = vld [vmem:[#allocation4 + $0xb4] sm:$0xf]
    %v685 = vld [vmem:[#allocation4 + $0xb8] sm:$0xf]
    %v686 = vld [vmem:[#allocation4 + $0xbc] sm:$0xf]
    %v687 = vld [vmem:[#allocation4 + $0xc0] sm:$0xf]
    %v688 = vld [vmem:[#allocation4 + $0xc4] sm:$0xf]
    %v689 = vld [vmem:[#allocation4 + $0xc8] sm:$0xf]
    %v690 = vld [vmem:[#allocation4 + $0xcc] sm:$0xf]
    %v691 = vld [vmem:[#allocation4 + $0xd0] sm:$0xf]
    %v692 = vld [vmem:[#allocation4 + $0xd4] sm:$0xf]
    %v693 = vld [vmem:[#allocation4 + $0xd8] sm:$0xf]
    %v694 = vld [vmem:[#allocation4 + $0xdc] sm:$0xf]
    %v695 = vld [vmem:[#allocation4 + $0xe0] sm:$0xf]
    %v696 = vld [vmem:[#allocation4 + $0xe4] sm:$0xf]
    %v697 = vld [vmem:[#allocation4 + $0xe8] sm:$0xf]
    %v698 = vld [vmem:[#allocation4 + $0xec] sm:$0xf]
    %v699 = vld [vmem:[#allocation4 + $0xf0] sm:$0xf]
    %v700 = vld [vmem:[#allocation4 + $0xf4] sm:$0xf]
    %v701 = vld [vmem:[#allocation4 + $0xf8] sm:$0xf]
    %v702 = vld [vmem:[#allocation4 + $0xfc] sm:$0xf]
    %v703 = vld [vmem:[%s7] sm:$0x3]
    %v705 = vsel %vm528, %v703, 0
    %707 = vmatprep.subr.bf16.mxu0 0
    %708 = vmatpush1.bf16.msra.mxu0 %v705
    %709 = vmatprep.subr.bf16.mxu0 0
    %710 = vmatpush1.bf16.msra.mxu0 0
    %711 = vmatprep.subr.bf16.mxu0 0
    %712 = vmatpush1.bf16.msra.mxu0 0
    %713 = vmatprep.subr.bf16.mxu0 0
    %714 = vmatpush1.bf16.msra.mxu0 0
    %715 = vmatprep.subr.bf16.mxu0 0
    %716 = vmatpush1.bf16.msra.mxu0 0
    %717 = vmatprep.subr.bf16.mxu0 0
    %718 = vmatpush1.bf16.msra.mxu0 0
    %719 = vmatprep.subr.bf16.mxu0 0
    %720 = vmatpush1.bf16.msra.mxu0 0
    %721 = vmatprep.subr.bf16.mxu0 0
    %722 = vmatpush1.bf16.msra.mxu0 0
    %723 = vmatprep.subr.bf16.mxu0 0
    %724 = vmatpush1.bf16.msra.mxu0 0
    %725 = vmatprep.subr.bf16.mxu0 0
    %726 = vmatpush1.bf16.msra.mxu0 0
    %727 = vmatprep.subr.bf16.mxu0 0
    %728 = vmatpush1.bf16.msra.mxu0 0
    %729 = vmatprep.subr.bf16.mxu0 0
    %730 = vmatpush1.bf16.msra.mxu0 0
    %731 = vmatprep.subr.bf16.mxu0 0
    %732 = vmatpush1.bf16.msra.mxu0 0
    %733 = vmatprep.subr.bf16.mxu0 0
    %734 = vmatpush1.bf16.msra.mxu0 0
    %735 = vmatprep.subr.bf16.mxu0 0
    %736 = vmatpush1.bf16.msra.mxu0 0
    %737 = vmatprep.subr.bf16.mxu0 0
    %738 = vmatpush1.bf16.msra.mxu0 0
    %739 = vmatprep.mubr.bf16.mxu0 0
    %740 = vmatmul.mubr.bf16.gmra.mrb[0].mxu0 %v526
    %v741 = vpop.f32.mrb[0].mxu0
    %v742 = vadd.f32 0.0, %v741
    %v743 = vpop.f32.mrb[0].mxu0
    %v744 = vpop.f32.mrb[0].mxu0
    %v745 = vadd.f32 0.0, %v744
    %v746 = vpop.f32.mrb[0].mxu0
    %747 = vdwg.mxu0
    %v812 = vunpack.c.l.b16 %v639
    %v813 = vunpack.c.l.b16 %v640
    %v814 = vunpack.c.l.b16 %v641
    %v815 = vunpack.c.l.b16 %v642
    %v816 = vunpack.c.l.b16 %v643
    %v817 = vunpack.c.l.b16 %v644
    %v818 = vunpack.c.l.b16 %v645
    %v819 = vunpack.c.l.b16 %v646
    %v820 = vunpack.c.l.b16 %v647
    %v821 = vunpack.c.l.b16 %v648
    %v822 = vunpack.c.l.b16 %v649
    %v823 = vunpack.c.l.b16 %v650
    %v824 = vunpack.c.l.b16 %v651
    %v825 = vunpack.c.l.b16 %v652
    %v826 = vunpack.c.l.b16 %v653
    %v827 = vunpack.c.l.b16 %v654
    %v828 = vunpack.c.l.b16 %v655
    %v829 = vunpack.c.l.b16 %v656
    %v830 = vunpack.c.l.b16 %v657
    %v831 = vunpack.c.l.b16 %v658
    %v832 = vunpack.c.l.b16 %v659
    %v833 = vunpack.c.l.b16 %v660
    %v834 = vunpack.c.l.b16 %v661
    %v835 = vunpack.c.l.b16 %v662
    %v836 = vunpack.c.l.b16 %v663
    %v837 = vunpack.c.l.b16 %v664
    %v838 = vunpack.c.l.b16 %v665
    %v839 = vunpack.c.l.b16 %v666
    %v840 = vunpack.c.l.b16 %v667
    %v841 = vunpack.c.l.b16 %v668
    %v842 = vunpack.c.l.b16 %v669
    %v843 = vunpack.c.l.b16 %v670
    %v844 = vunpack.c.l.b16 %v671
    %v845 = vunpack.c.l.b16 %v672
    %v846 = vunpack.c.l.b16 %v673
    %v847 = vunpack.c.l.b16 %v674
    %v848 = vunpack.c.l.b16 %v675
    %v849 = vunpack.c.l.b16 %v676
    %v850 = vunpack.c.l.b16 %v677
    %v851 = vunpack.c.l.b16 %v678
    %v852 = vunpack.c.l.b16 %v679
    %v853 = vunpack.c.l.b16 %v680
    %v854 = vunpack.c.l.b16 %v681
    %v855 = vunpack.c.l.b16 %v682
    %v856 = vunpack.c.l.b16 %v683
    %v857 = vunpack.c.l.b16 %v684
    %v858 = vunpack.c.l.b16 %v685
    %v859 = vunpack.c.l.b16 %v686
    %v860 = vunpack.c.l.b16 %v687
    %v861 = vunpack.c.l.b16 %v688
    %v862 = vunpack.c.l.b16 %v689
    %v863 = vunpack.c.l.b16 %v690
    %v864 = vunpack.c.l.b16 %v691
    %v865 = vunpack.c.l.b16 %v692
    %v866 = vunpack.c.l.b16 %v693
    %v867 = vunpack.c.l.b16 %v694
    %v868 = vunpack.c.l.b16 %v695
    %v869 = vunpack.c.l.b16 %v696
    %v870 = vunpack.c.l.b16 %v697
    %v871 = vunpack.c.l.b16 %v698
    %v872 = vunpack.c.l.b16 %v699
    %v873 = vunpack.c.l.b16 %v700
    %v874 = vunpack.c.l.b16 %v701
    %v875 = vunpack.c.l.b16 %v702
    %v876 = vpack.c.b16 %v813, %v812
    %v877 = vpack.c.b16 %v815, %v814
    %v878 = vpack.c.b16 %v817, %v816
    %v879 = vpack.c.b16 %v819, %v818
    %v880 = vpack.c.b16 %v821, %v820
    %v881 = vpack.c.b16 %v823, %v822
    %v882 = vpack.c.b16 %v825, %v824
    %v883 = vpack.c.b16 %v827, %v826
    %v884 = vpack.c.b16 %v829, %v828
    %v885 = vpack.c.b16 %v831, %v830
    %v886 = vpack.c.b16 %v833, %v832
    %v887 = vpack.c.b16 %v835, %v834
    %v888 = vpack.c.b16 %v837, %v836
    %v889 = vpack.c.b16 %v839, %v838
    %v890 = vpack.c.b16 %v841, %v840
    %v891 = vpack.c.b16 %v843, %v842
    %v892 = vpack.c.b16 %v845, %v844
    %v893 = vpack.c.b16 %v847, %v846
    %v894 = vpack.c.b16 %v849, %v848
    %v895 = vpack.c.b16 %v851, %v850
    %v896 = vpack.c.b16 %v853, %v852
    %v897 = vpack.c.b16 %v855, %v854
    %v898 = vpack.c.b16 %v857, %v856
    %v899 = vpack.c.b16 %v859, %v858
    %v900 = vpack.c.b16 %v861, %v860
    %v901 = vpack.c.b16 %v863, %v862
    %v902 = vpack.c.b16 %v865, %v864
    %v903 = vpack.c.b16 %v867, %v866
    %v904 = vpack.c.b16 %v869, %v868
    %v905 = vpack.c.b16 %v871, %v870
    %v906 = vpack.c.b16 %v873, %v872
    %v907 = vpack.c.b16 %v875, %v874
    %940 = vmatprep.subr.bf16.mxu0 0
    %941 = vmatpush1.bf16.msra.mxu0 %v876
    %942 = vmatprep.subr.bf16.mxu0 0
    %943 = vmatpush1.bf16.msra.mxu0 %v877
    %944 = vmatprep.subr.bf16.mxu0 0
    %945 = vmatpush1.bf16.msra.mxu0 %v878
    %946 = vmatprep.subr.bf16.mxu0 0
    %947 = vmatpush1.bf16.msra.mxu0 %v879
    %948 = vmatprep.subr.bf16.mxu0 0
    %949 = vmatpush1.bf16.msra.mxu0 %v880
    %950 = vmatprep.subr.bf16.mxu0 0
    %951 = vmatpush1.bf16.msra.mxu0 %v881
    %952 = vmatprep.subr.bf16.mxu0 0
    %953 = vmatpush1.bf16.msra.mxu0 %v882
    %954 = vmatprep.subr.bf16.mxu0 0
    %955 = vmatpush1.bf16.msra.mxu0 %v883
    %956 = vmatprep.subr.bf16.mxu0 0
    %957 = vmatpush1.bf16.msra.mxu0 %v884
    %958 = vmatprep.subr.bf16.mxu0 0
    %959 = vmatpush1.bf16.msra.mxu0 %v885
    %960 = vmatprep.subr.bf16.mxu0 0
    %961 = vmatpush1.bf16.msra.mxu0 %v886
    %962 = vmatprep.subr.bf16.mxu0 0
    %963 = vmatpush1.bf16.msra.mxu0 %v887
    %964 = vmatprep.subr.bf16.mxu0 0
    %965 = vmatpush1.bf16.msra.mxu0 %v888
    %966 = vmatprep.subr.bf16.mxu0 0
    %967 = vmatpush1.bf16.msra.mxu0 %v889
    %968 = vmatprep.subr.bf16.mxu0 0
    %969 = vmatpush1.bf16.msra.mxu0 %v890
    %970 = vmatprep.subr.bf16.mxu0 0
    %971 = vmatpush1.bf16.msra.mxu0 %v891
    %972 = vmatprep.mubr.bf16.mxu0 %v636
    %973 = vmatmul.mubr.bf16.gmra.mrb[0].mxu0 %v635
    %v974 = vpop.f32.mrb[0].mxu0
    %v975 = vadd.f32 %v742, %v974
    %v976 = vpop.f32.mrb[0].mxu0
    %v977 = vpop.f32.mrb[0].mxu0
    %v978 = vadd.f32 %v745, %v977
    %v979 = vpop.f32.mrb[0].mxu0
    %980 = vdwg.mxu0
    %981 = vmatprep.subr.bf16.mxu0 0
    %982 = vmatpush1.bf16.msra.mxu0 %v892
    %983 = vmatprep.subr.bf16.mxu0 0
    %984 = vmatpush1.bf16.msra.mxu0 %v893
    %985 = vmatprep.subr.bf16.mxu0 0
    %986 = vmatpush1.bf16.msra.mxu0 %v894
    %987 = vmatprep.subr.bf16.mxu0 0
    %988 = vmatpush1.bf16.msra.mxu0 %v895
    %989 = vmatprep.subr.bf16.mxu0 0
    %990 = vmatpush1.bf16.msra.mxu0 %v896
    %991 = vmatprep.subr.bf16.mxu0 0
    %992 = vmatpush1.bf16.msra.mxu0 %v897
    %993 = vmatprep.subr.bf16.mxu0 0
    %994 = vmatpush1.bf16.msra.mxu0 %v898
    %995 = vmatprep.subr.bf16.mxu0 0
    %996 = vmatpush1.bf16.msra.mxu0 %v899
    %997 = vmatprep.subr.bf16.mxu0 0
    %998 = vmatpush1.bf16.msra.mxu0 %v900
    %999 = vmatprep.subr.bf16.mxu0 0
    %1000 = vmatpush1.bf16.msra.mxu0 %v901
    %1001 = vmatprep.subr.bf16.mxu0 0
    %1002 = vmatpush1.bf16.msra.mxu0 %v902
    %1003 = vmatprep.subr.bf16.mxu0 0
    %1004 = vmatpush1.bf16.msra.mxu0 %v903
    %1005 = vmatprep.subr.bf16.mxu0 0
    %1006 = vmatpush1.bf16.msra.mxu0 %v904
    %1007 = vmatprep.subr.bf16.mxu0 0
    %1008 = vmatpush1.bf16.msra.mxu0 %v905
    %1009 = vmatprep.subr.bf16.mxu0 0
    %1010 = vmatpush1.bf16.msra.mxu0 %v906
    %1011 = vmatprep.subr.bf16.mxu0 0
    %1012 = vmatpush1.bf16.msra.mxu0 %v907
    %1013 = vmatprep.mubr.bf16.mxu0 %v638
    %1014 = vmatmul.mubr.bf16.gmra.mrb[0].mxu0 %v637
    %v1015 = vpop.f32.mrb[0].mxu0
    %v1016 = vadd.f32 %v975, %v1015
    %v1017 = vpop.f32.mrb[0].mxu0
    %v1018 = vpop.f32.mrb[0].mxu0
    %v1019 = vadd.f32 %v978, %v1018
    %v1020 = vpop.f32.mrb[0].mxu0
    %1021 = vdwg.mxu0
    %v1022 = vld [vmem:[%s8] sm:$0x1]
    %v1024 = vlaneseq
    %v1025 = vshrl.u32 %v1024, 7
    %v1026 = vsub.s32 0, %v1025
    %v1027 = vrot.slane %v1022, %v1026
    %v1029 = vadd.f32 %v1016, %v1027
    %v1030 = vadd.f32 %v1019, %v1027
    %1031 = vst [vmem:[%s9] sm:$0xff] %v1029
    %s1032 = scalar_lea.vmem %s9, 8
    %1033 = vst [vmem:[%s1032] sm:$0xff] %v1030
    // Predicated region
    $region46: #{moe_multitask_forward.1} parent=1 // pred_check
      _
    $region47: #{moe_multitask_forward.1} parent=1 // pred_check_branch
      %1035 = sbr.rel (0) target = $region49
    $region48: #{moe_multitask_forward.1} parent=1 // pred_region
      _
    $region49: #{moe_multitask_forward.1} parent=1 // pred_fallthru
      _
    // Predicated region
    $region50: #{moe_multitask_forward.1} parent=1 // pred_check
      _
    $region51: #{moe_multitask_forward.1} parent=1 // pred_check_branch
      %1037 = sbr.rel (0) target = $region53
    $region52: #{moe_multitask_forward.1} parent=1 // pred_region
      _
    $region53: #{moe_multitask_forward.1} parent=1 // pred_fallthru
      _
    %1038 = vsyncpa [#allocation3], 1
    %1039 = vsyncpa [#allocation5], 1

</llo_original>
